<compile_context>
chip_gen: v7x
topology: tpu7x:2x2x1
jax: 0.10.0
libtpu: 0.0.40
codegen_flags: <defaults>
</compile_context>

<pallas_src>
import jax
import jax.numpy as jnp
from jax.experimental import pallas as pl
from jax.experimental.pallas import tpu as pltpu

KSIZE = 3  # module uses nn.Conv2d(..., 3, ...)


def _make_conv3x3_sin_kernel(H, W, Cout, Cout_p):
    M = H * W

    def kernel(w_ref, x_ref, o_ref):
        # w_ref: (9, Cout_p, Cin)  resident tap weights (rows >= Cout are zero)
        # x_ref: (Cin, L)          one sample, flattened H*W, zero-padded by W+1 per side
        # o_ref: (Cout, M)         this sample's output rows, lane dim = H*W
        col = jax.lax.broadcasted_iota(jnp.int32, (1, M), 1) % W
        left_ok = (col != 0).astype(jnp.float32)          # kill horizontal wrap for dx=-1
        right_ok = (col != (W - 1)).astype(jnp.float32)   # kill horizontal wrap for dx=+1

        acc = jnp.zeros((Cout_p, M), jnp.float32)
        for dy in range(KSIZE):
            for dx in range(KSIZE):
                tap = dy * KSIZE + dx
                # Source pixels for this tap sit at a constant flat offset dy*W + dx.
                src = x_ref[:, pl.ds(dy * W + dx, M)]                 # (Cin, M)
                part = jnp.dot(w_ref[tap], src,
                               preferred_element_type=jnp.float32)    # (Cout_p, M)
                if dx == 0:
                    part = part * left_ok
                elif dx == 2:
                    part = part * right_ok
                acc = acc + part

        o_ref[...] = jnp.sin(acc[:Cout]).astype(o_ref.dtype)

    return kernel


def simple_wavelet_net_forward(x_nchw, weight_oihw, compute_dtype=jnp.float32):
    """Forward pass matching simplewaveletNet.forward.

    x_nchw:      (N, Cin, H, W)    float32
    weight_oihw: (Cout, Cin, 3, 3) float32  (PyTorch conv weight layout)
    returns:     (N, Cout, H, W)   float32
    """
    N, Cin, H, W = x_nchw.shape
    Cout = weight_oihw.shape[0]
    M = H * W
    L = M + 2 * W + 2                       # flat length incl. (W+1)-wide zero halo per side
    Cout_p = ((Cout + 7) // 8) * 8

    # (N, Cin, H, W) -> (N, Cin, H*W) is layout-free; ONE zero-pad supplies the vertical
    # halo (replaces the previous 9x im2col blow-up + transposes).
    x_flat = x_nchw.reshape(N, Cin, M).astype(compute_dtype)
    x_flat = jnp.pad(x_flat, ((0, 0), (0, 0), (W + 1, W + 1)))

    # (Cout, Cin, 3, 3) -> (9, Cout_p, Cin) with tap index dy*3 + dx (rows >= Cout zero).
    w_taps = weight_oihw.astype(compute_dtype).transpose(2, 3, 0, 1).reshape(
        KSIZE * KSIZE, Cout, Cin)
    w_taps = jnp.pad(w_taps, ((0, 0), (0, Cout_p - Cout), (0, 0)))

    kernel = _make_conv3x3_sin_kernel(H, W, Cout, Cout_p)

    itemsize = jnp.dtype(compute_dtype).itemsize
    x_block_bytes = Cin * L * itemsize
    o_block_bytes = Cout * M * 4
    w_bytes = KSIZE * KSIZE * Cout_p * Cin * itemsize
    est = 2 * (x_block_bytes + o_block_bytes) + w_bytes + 4 * (Cout_p + Cin) * M * 4
    vmem_limit = int(min(max(2 * est, 24 << 20), 56 << 20))  # safe on v5e/v6e/v7x

    cost = pl.CostEstimate(
        flops=2 * N * Cout_p * KSIZE * KSIZE * Cin * M,
        transcendentals=N * Cout * M,
        bytes_accessed=N * (x_block_bytes + o_block_bytes) + w_bytes,
    )

    out_flat = pl.pallas_call(
        kernel,
        out_shape=jax.ShapeDtypeStruct((N, Cout, M), jnp.float32),
        grid_spec=pltpu.PrefetchScalarGridSpec(
            num_scalar_prefetch=0,
            grid=(N,),
            in_specs=[
                pl.BlockSpec((KSIZE * KSIZE, Cout_p, Cin), lambda n: (0, 0, 0)),  # resident
                pl.BlockSpec((None, Cin, L), lambda n: (n, 0, 0)),                # per sample
            ],
            out_specs=pl.BlockSpec((None, Cout, M), lambda n: (n, 0, 0)),
        ),
        compiler_params=pltpu.CompilerParams(
            dimension_semantics=("parallel",),
            vmem_limit_bytes=vmem_limit,
        ),
        cost_estimate=cost,
    )(w_taps, x_flat)

    # (N, Cout, H*W) -> (N, Cout, H, W): layout-free reshape, no transpose, no slice.
    return out_flat.reshape(N, Cout, H, W)


def _reference_forward(x_nchw, weight_oihw):
    """Pure-JAX reference (conv + sin), NCHW semantics identical to PyTorch."""
    y = jax.lax.conv_general_dilated(
        x_nchw,
        weight_oihw,
        window_strides=(1, 1),
        padding="SAME",
        dimension_numbers=("NCHW", "OIHW", "NCHW"),
    )
    return jnp.sin(y)


if __name__ == "__main__":
    # Small shapes consistent with the module (inchannel -> outchannel, k=3 'same' conv).
    N, Cin, H, W = 2, 4, 16, 16
    Cout = 3

    key = jax.random.PRNGKey(0)
    kx, kw = jax.random.split(key)

    x = jax.random.normal(kx, (N, Cin, H, W), dtype=jnp.float32)

    # Deterministic synthetic conv weight, shaped like nn.Conv2d(Cin, Cout, 3).weight.
    fan_in = Cin * KSIZE * KSIZE
    bound = 1.0 / jnp.sqrt(jnp.float32(fan_in))
    weight = jax.random.uniform(
        kw, (Cout, Cin, KSIZE, KSIZE), dtype=jnp.float32, minval=-bound, maxval=bound
    )

    out = jax.block_until_ready(simple_wavelet_net_forward(x, weight))
    ref = jax.block_until_ready(_reference_forward(x, weight))

    assert out.shape == (N, Cout, H, W)
    assert jnp.allclose(out, ref, rtol=1e-4, atol=2e-5)

    print("KERNEL_OK")
</pallas_src>

<mosaic_0001>
module attributes {stable_mosaic.version = 11 : i64} {
  func.func @kernel(%arg0: i32, %arg1: memref<9x8x4xf32, #tpu.memory_space<vmem>>, %arg2: memref<1x4x290xf32, #tpu.memory_space<vmem>>, %arg3: memref<1x3x256xf32, #tpu.memory_space<vmem>>) attributes {dimension_semantics = [#tpu.dimension_semantics<parallel>], iteration_bounds = array<i64: 2>, scalar_prefetch = 0 : i64, scratch_operands = 0 : i64, tpu.core_type = #tpu.core_type<tc>, window_params = [{pipeline_mode = #tpu.pipeline_mode<synchronous>, transform_indices = @transform_0, window_bounds = array<i64: 9, 8, 4>}, {transform_indices = @transform_1, window_bounds = array<i64: 1, 4, 290>}, {transform_indices = @transform_2, window_bounds = array<i64: 1, 3, 256>}]} {
    %0 = tpu.iota {dimensions = array<i32: 1>} : vector<1x256xi32>
    %c16_i32 = arith.constant 16 : i32
    %c0_i32 = arith.constant 0 : i32
    %1 = arith.cmpi eq, %c16_i32, %c0_i32 : i32
    %c1_i32 = arith.constant 1 : i32
    %2 = arith.select %1, %c1_i32, %c16_i32 : i32
    %3 = vector.broadcast %2 : i32 to vector<1x256xi32>
    %4 = arith.remsi %0, %3 : vector<1x256xi32>
    %c0_i32_0 = arith.constant 0 : i32
    %5 = vector.broadcast %c0_i32_0 : i32 to vector<1x256xi32>
    %6 = arith.cmpi ne, %4, %5 : vector<1x256xi32>
    %c0_i32_1 = arith.constant 0 : i32
    %7 = vector.broadcast %c0_i32_1 : i32 to vector<1x256xi32>
    %8 = arith.cmpi slt, %4, %7 : vector<1x256xi32>
    %c0_i32_2 = arith.constant 0 : i32
    %9 = arith.cmpi slt, %2, %c0_i32_2 : i32
    %10 = vector.broadcast %9 : i1 to vector<1x256xi1>
    %11 = vector.broadcast %10 : vector<1x256xi1> to vector<1x256xi1>
    %12 = arith.xori %8, %11 : vector<1x256xi1>
    %13 = arith.andi %12, %6 : vector<1x256xi1>
    %14 = vector.broadcast %2 : i32 to vector<1x256xi32>
    %15 = arith.addi %4, %14 : vector<1x256xi32>
    %16 = arith.select %13, %15, %4 : vector<1x256xi1>, vector<1x256xi32>
    %c0_i32_3 = arith.constant 0 : i32
    %17 = vector.broadcast %c0_i32_3 : i32 to vector<1x256xi32>
    %18 = arith.cmpi ne, %16, %17 : vector<1x256xi32>
    %19 = arith.extui %18 : vector<1x256xi1> to vector<1x256xi32>
    %20 = arith.sitofp %19 : vector<1x256xi32> to vector<1x256xf32>
    %c15_i32 = arith.constant 15 : i32
    %21 = vector.broadcast %c15_i32 : i32 to vector<1x256xi32>
    %22 = arith.cmpi ne, %16, %21 : vector<1x256xi32>
    %23 = arith.extui %22 : vector<1x256xi1> to vector<1x256xi32>
    %24 = arith.sitofp %23 : vector<1x256xi32> to vector<1x256xf32>
    %cst = arith.constant 0.000000e+00 : f32
    %25 = vector.broadcast %cst : f32 to vector<8x256xf32>
    %c0 = arith.constant 0 : index
    %c0_4 = arith.constant 0 : index
    %c0_5 = arith.constant 0 : index
    %26 = vector.load %arg2[%c0, %c0_4, %c0_5] : memref<1x4x290xf32, #tpu.memory_space<vmem>>, vector<1x4x256xf32>
    %27 = vector.shape_cast %26 : vector<1x4x256xf32> to vector<4x256xf32>
    %c0_6 = arith.constant 0 : index
    %c0_7 = arith.constant 0 : index
    %c0_8 = arith.constant 0 : index
    %28 = vector.load %arg1[%c0_6, %c0_7, %c0_8] : memref<9x8x4xf32, #tpu.memory_space<vmem>>, vector<1x8x4xf32>
    %29 = vector.shape_cast %28 : vector<1x8x4xf32> to vector<8x4xf32>
    %cst_9 = arith.constant dense<0.000000e+00> : vector<8x256xf32>
    %30 = tpu.matmul %29, %27, %cst_9 {dimension_numbers = #tpu.dot_dimension_numbers<[1], [0], [0], [1], [0, 0, 1, 1], [], []>} : vector<8x4xf32>, vector<4x256xf32>, vector<8x256xf32> -> vector<8x256xf32>
    %31 = vector.broadcast %20 : vector<1x256xf32> to vector<8x256xf32>
    %32 = arith.mulf %30, %31 : vector<8x256xf32>
    %33 = arith.addf %25, %32 : vector<8x256xf32>
    %c0_10 = arith.constant 0 : index
    %c0_11 = arith.constant 0 : index
    %c1 = arith.constant 1 : index
    %34 = vector.load %arg2[%c0_10, %c0_11, %c1] : memref<1x4x290xf32, #tpu.memory_space<vmem>>, vector<1x4x256xf32>
    %35 = vector.shape_cast %34 : vector<1x4x256xf32> to vector<4x256xf32>
    %c1_12 = arith.constant 1 : index
    %c0_13 = arith.constant 0 : index
    %c0_14 = arith.constant 0 : index
    %36 = vector.load %arg1[%c1_12, %c0_13, %c0_14] : memref<9x8x4xf32, #tpu.memory_space<vmem>>, vector<1x8x4xf32>
    %37 = vector.shape_cast %36 : vector<1x8x4xf32> to vector<8x4xf32>
    %cst_15 = arith.constant dense<0.000000e+00> : vector<8x256xf32>
    %38 = tpu.matmul %37, %35, %cst_15 {dimension_numbers = #tpu.dot_dimension_numbers<[1], [0], [0], [1], [0, 0, 1, 1], [], []>} : vector<8x4xf32>, vector<4x256xf32>, vector<8x256xf32> -> vector<8x256xf32>
    %39 = arith.addf %33, %38 : vector<8x256xf32>
    %c0_16 = arith.constant 0 : index
    %c0_17 = arith.constant 0 : index
    %c2 = arith.constant 2 : index
    %40 = vector.load %arg2[%c0_16, %c0_17, %c2] : memref<1x4x290xf32, #tpu.memory_space<vmem>>, vector<1x4x256xf32>
    %41 = vector.shape_cast %40 : vector<1x4x256xf32> to vector<4x256xf32>
    %c2_18 = arith.constant 2 : index
    %c0_19 = arith.constant 0 : index
    %c0_20 = arith.constant 0 : index
    %42 = vector.load %arg1[%c2_18, %c0_19, %c0_20] : memref<9x8x4xf32, #tpu.memory_space<vmem>>, vector<1x8x4xf32>
    %43 = vector.shape_cast %42 : vector<1x8x4xf32> to vector<8x4xf32>
    %cst_21 = arith.constant dense<0.000000e+00> : vector<8x256xf32>
    %44 = tpu.matmul %43, %41, %cst_21 {dimension_numbers = #tpu.dot_dimension_numbers<[1], [0], [0], [1], [0, 0, 1, 1], [], []>} : vector<8x4xf32>, vector<4x256xf32>, vector<8x256xf32> -> vector<8x256xf32>
    %45 = vector.broadcast %24 : vector<1x256xf32> to vector<8x256xf32>
    %46 = arith.mulf %44, %45 : vector<8x256xf32>
    %47 = arith.addf %39, %46 : vector<8x256xf32>
    %c0_22 = arith.constant 0 : index
    %c0_23 = arith.constant 0 : index
    %c16 = arith.constant 16 : index
    %48 = vector.load %arg2[%c0_22, %c0_23, %c16] : memref<1x4x290xf32, #tpu.memory_space<vmem>>, vector<1x4x256xf32>
    %49 = vector.shape_cast %48 : vector<1x4x256xf32> to vector<4x256xf32>
    %c3 = arith.constant 3 : index
    %c0_24 = arith.constant 0 : index
    %c0_25 = arith.constant 0 : index
    %50 = vector.load %arg1[%c3, %c0_24, %c0_25] : memref<9x8x4xf32, #tpu.memory_space<vmem>>, vector<1x8x4xf32>
    %51 = vector.shape_cast %50 : vector<1x8x4xf32> to vector<8x4xf32>
    %cst_26 = arith.constant dense<0.000000e+00> : vector<8x256xf32>
    %52 = tpu.matmul %51, %49, %cst_26 {dimension_numbers = #tpu.dot_dimension_numbers<[1], [0], [0], [1], [0, 0, 1, 1], [], []>} : vector<8x4xf32>, vector<4x256xf32>, vector<8x256xf32> -> vector<8x256xf32>
    %53 = vector.broadcast %20 : vector<1x256xf32> to vector<8x256xf32>
    %54 = arith.mulf %52, %53 : vector<8x256xf32>
    %55 = arith.addf %47, %54 : vector<8x256xf32>
    %c0_27 = arith.constant 0 : index
    %c0_28 = arith.constant 0 : index
    %c17 = arith.constant 17 : index
    %56 = vector.load %arg2[%c0_27, %c0_28, %c17] : memref<1x4x290xf32, #tpu.memory_space<vmem>>, vector<1x4x256xf32>
    %57 = vector.shape_cast %56 : vector<1x4x256xf32> to vector<4x256xf32>
    %c4 = arith.constant 4 : index
    %c0_29 = arith.constant 0 : index
    %c0_30 = arith.constant 0 : index
    %58 = vector.load %arg1[%c4, %c0_29, %c0_30] : memref<9x8x4xf32, #tpu.memory_space<vmem>>, vector<1x8x4xf32>
    %59 = vector.shape_cast %58 : vector<1x8x4xf32> to vector<8x4xf32>
    %cst_31 = arith.constant dense<0.000000e+00> : vector<8x256xf32>
    %60 = tpu.matmul %59, %57, %cst_31 {dimension_numbers = #tpu.dot_dimension_numbers<[1], [0], [0], [1], [0, 0, 1, 1], [], []>} : vector<8x4xf32>, vector<4x256xf32>, vector<8x256xf32> -> vector<8x256xf32>
    %61 = arith.addf %55, %60 : vector<8x256xf32>
    %c0_32 = arith.constant 0 : index
    %c0_33 = arith.constant 0 : index
    %c18 = arith.constant 18 : index
    %62 = vector.load %arg2[%c0_32, %c0_33, %c18] : memref<1x4x290xf32, #tpu.memory_space<vmem>>, vector<1x4x256xf32>
    %63 = vector.shape_cast %62 : vector<1x4x256xf32> to vector<4x256xf32>
    %c5 = arith.constant 5 : index
    %c0_34 = arith.constant 0 : index
    %c0_35 = arith.constant 0 : index
    %64 = vector.load %arg1[%c5, %c0_34, %c0_35] : memref<9x8x4xf32, #tpu.memory_space<vmem>>, vector<1x8x4xf32>
    %65 = vector.shape_cast %64 : vector<1x8x4xf32> to vector<8x4xf32>
    %cst_36 = arith.constant dense<0.000000e+00> : vector<8x256xf32>
    %66 = tpu.matmul %65, %63, %cst_36 {dimension_numbers = #tpu.dot_dimension_numbers<[1], [0], [0], [1], [0, 0, 1, 1], [], []>} : vector<8x4xf32>, vector<4x256xf32>, vector<8x256xf32> -> vector<8x256xf32>
    %67 = vector.broadcast %24 : vector<1x256xf32> to vector<8x256xf32>
    %68 = arith.mulf %66, %67 : vector<8x256xf32>
    %69 = arith.addf %61, %68 : vector<8x256xf32>
    %c0_37 = arith.constant 0 : index
    %c0_38 = arith.constant 0 : index
    %c32 = arith.constant 32 : index
    %70 = vector.load %arg2[%c0_37, %c0_38, %c32] : memref<1x4x290xf32, #tpu.memory_space<vmem>>, vector<1x4x256xf32>
    %71 = vector.shape_cast %70 : vector<1x4x256xf32> to vector<4x256xf32>
    %c6 = arith.constant 6 : index
    %c0_39 = arith.constant 0 : index
    %c0_40 = arith.constant 0 : index
    %72 = vector.load %arg1[%c6, %c0_39, %c0_40] : memref<9x8x4xf32, #tpu.memory_space<vmem>>, vector<1x8x4xf32>
    %73 = vector.shape_cast %72 : vector<1x8x4xf32> to vector<8x4xf32>
    %cst_41 = arith.constant dense<0.000000e+00> : vector<8x256xf32>
    %74 = tpu.matmul %73, %71, %cst_41 {dimension_numbers = #tpu.dot_dimension_numbers<[1], [0], [0], [1], [0, 0, 1, 1], [], []>} : vector<8x4xf32>, vector<4x256xf32>, vector<8x256xf32> -> vector<8x256xf32>
    %75 = vector.broadcast %20 : vector<1x256xf32> to vector<8x256xf32>
    %76 = arith.mulf %74, %75 : vector<8x256xf32>
    %77 = arith.addf %69, %76 : vector<8x256xf32>
    %c0_42 = arith.constant 0 : index
    %c0_43 = arith.constant 0 : index
    %c33 = arith.constant 33 : index
    %78 = vector.load %arg2[%c0_42, %c0_43, %c33] : memref<1x4x290xf32, #tpu.memory_space<vmem>>, vector<1x4x256xf32>
    %79 = vector.shape_cast %78 : vector<1x4x256xf32> to vector<4x256xf32>
    %c7 = arith.constant 7 : index
    %c0_44 = arith.constant 0 : index
    %c0_45 = arith.constant 0 : index
    %80 = vector.load %arg1[%c7, %c0_44, %c0_45] : memref<9x8x4xf32, #tpu.memory_space<vmem>>, vector<1x8x4xf32>
    %81 = vector.shape_cast %80 : vector<1x8x4xf32> to vector<8x4xf32>
    %cst_46 = arith.constant dense<0.000000e+00> : vector<8x256xf32>
    %82 = tpu.matmul %81, %79, %cst_46 {dimension_numbers = #tpu.dot_dimension_numbers<[1], [0], [0], [1], [0, 0, 1, 1], [], []>} : vector<8x4xf32>, vector<4x256xf32>, vector<8x256xf32> -> vector<8x256xf32>
    %83 = arith.addf %77, %82 : vector<8x256xf32>
    %c0_47 = arith.constant 0 : index
    %c0_48 = arith.constant 0 : index
    %c34 = arith.constant 34 : index
    %84 = vector.load %arg2[%c0_47, %c0_48, %c34] : memref<1x4x290xf32, #tpu.memory_space<vmem>>, vector<1x4x256xf32>
    %85 = vector.shape_cast %84 : vector<1x4x256xf32> to vector<4x256xf32>
    %c8 = arith.constant 8 : index
    %c0_49 = arith.constant 0 : index
    %c0_50 = arith.constant 0 : index
    %86 = vector.load %arg1[%c8, %c0_49, %c0_50] : memref<9x8x4xf32, #tpu.memory_space<vmem>>, vector<1x8x4xf32>
    %87 = vector.shape_cast %86 : vector<1x8x4xf32> to vector<8x4xf32>
    %cst_51 = arith.constant dense<0.000000e+00> : vector<8x256xf32>
    %88 = tpu.matmul %87, %85, %cst_51 {dimension_numbers = #tpu.dot_dimension_numbers<[1], [0], [0], [1], [0, 0, 1, 1], [], []>} : vector<8x4xf32>, vector<4x256xf32>, vector<8x256xf32> -> vector<8x256xf32>
    %89 = vector.broadcast %24 : vector<1x256xf32> to vector<8x256xf32>
    %90 = arith.mulf %88, %89 : vector<8x256xf32>
    %91 = arith.addf %83, %90 : vector<8x256xf32>
    %92 = vector.extract_strided_slice %91 {offsets = [0, 0], sizes = [3, 256], strides = [1, 1]} : vector<8x256xf32> to vector<3x256xf32>
    %93 = math.sin %92 : vector<3x256xf32>
    %c0_52 = arith.constant 0 : index
    %c0_53 = arith.constant 0 : index
    %c0_54 = arith.constant 0 : index
    %94 = vector.load %arg3[%c0_52, %c0_53, %c0_54] : memref<1x3x256xf32, #tpu.memory_space<vmem>>, vector<1x3x256xf32>
    %95 = vector.shape_cast %94 : vector<1x3x256xf32> to vector<3x256xf32>
    %96 = vector.shape_cast %93 : vector<3x256xf32> to vector<1x3x256xf32>
    tpu.vector_store %arg3[%c0_52, %c0_53, %c0_54], %96 {strides = array<i32>} : memref<1x3x256xf32, #tpu.memory_space<vmem>>, vector<1x3x256xf32>,
    return
  }
  func.func @transform_0(%arg0: i32) -> (i32, i32, i32) {
    %c0_i32 = arith.constant 0 : i32
    %c0_i32_0 = arith.constant 0 : i32
    %c0_i32_1 = arith.constant 0 : i32
    %c0_i32_2 = arith.constant 0 : i32
    return %c0_i32, %c0_i32_0, %c0_i32_1 : i32, i32, i32
  }
  func.func @transform_1(%arg0: i32) -> (i32, i32, i32) {
    %c0_i32 = arith.constant 0 : i32
    %c0_i32_0 = arith.constant 0 : i32
    %c0_i32_1 = arith.constant 0 : i32
    return %arg0, %c0_i32, %c0_i32_0 : i32, i32, i32
  }
  func.func @transform_2(%arg0: i32) -> (i32, i32, i32) {
    %c0_i32 = arith.constant 0 : i32
    %c0_i32_0 = arith.constant 0 : i32
    %c0_i32_1 = arith.constant 0 : i32
    return %arg0, %c0_i32, %c0_i32_0 : i32, i32, i32
  }
}

</mosaic_0001>

<llo_original>
// kernel: tpu_custom_call.1
$region0: #{tpu_custom_call.1}
  #allocation0 [shape = 'u32[]', space=smem, size = 0x4, offset = 0x4, fixed_abs, tag = 'smem constant byte address 0x4 - core index']
  #allocation1 [shape = 'u32[144,128]{1,0:T(1,128)}', space=vmem, size = 0x12000, scoped, tag = 'internal scratch']
  %s0 = inlined_call_operand.vmem [shape: f32[9,8,4], index: 0, kind: input, shape index: {}]
  %s1 = inlined_call_operand.vmem [shape: f32[2,4,290], index: 1, kind: input, shape index: {}]
  %s2 = inlined_call_operand.vmem [shape: f32[2,3,256], index: 2, kind: output, shape index: {}]
  %s3 = sld [smem:[#allocation0]]
  $region41: #{tpu_custom_call.1} parent=0
    _
  %s5 = ssub.s32 1, %s3
  %s6 = scalar_select 0, %s5, %s3
  loop: start=0, step=1, limit=4
  $region2: #{tpu_custom_call.1} parent=0 // loop_pre_header
    _
  $region3: #{tpu_custom_call.1} parent=0 // loop_header
    %s8 = sphi 0, %s12
    %p9 = scmp.ge.s32.totalorder %s8, 4
    %s16 = sphi 0, %s16
    %s18 = sphi 0, %s16
    %s19 = sphi 0, %s18
    %s33 = sphi 0, %s19
    %s39 = sphi 0, %s41
    %s42 = sphi 0, %s39
    %s43 = sphi 0, %s42
    %s59 = sphi 0, %s43
    %s65 = sphi 0, %s67
    %s68 = sphi 0, %s65
    %s69 = sphi 0, %s68
    %s85 = sphi 0, %s69
  $region4: #{tpu_custom_call.1} parent=0 // loop_header_branch
    %11 = sbr.rel (%p9) target = $region8
  $region5: #{tpu_custom_call.1} parent=0 // loop_body
    %s13 = ssub.s32 %s8, 1
    %s14 = ssub.s32 %s8, 2
    %s15 = sadd.s32 %s8, 1
    %s17 = sadd.s32 %s16, 1
    %p20 = scmp.eq.s32.totalorder %s8, 1
    %p21 = scmp.ne.s32.totalorder %s16, %s18
    %p22 = scmp.eq.s32.totalorder %s8, 0
    %p23 = por %p21, %p22
    %p24 = scmp.ne.s32.totalorder %s16, %s18
    %p25 = scmp.eq.s32.totalorder %s13, 1
    %p26 = por %p24, %p25
    %p27 = scmp.ne.s32.totalorder %s18, %s19
    %p28 = scmp.eq.s32.totalorder %s13, 0
    %p29 = por %p27, %p28
    %p30 = scmp.ne.s32.totalorder %s18, %s19
    %p31 = scmp.eq.s32.totalorder %s14, 1
    %p32 = por %p30, %p31
    %p34 = scmp.ne.s32.totalorder %s19, %s33
    %p35 = scmp.eq.s32.totalorder %s14, 0
    %p36 = por %p34, %p35
    %s37 = ssub.s32 %s8, %s15
    %p38 = scmp.eq.s32.totalorder %s37, 0
    %s40 = sadd.s32 %s39, 1
    %s41 = scalar_select %p38, %s39, %s40
    %p44 = pneg %p38
    %p45 = scmp.eq.s32.totalorder %s8, 1
    %p46 = por %p44, %p45
    %p47 = scmp.ne.s32.totalorder %s39, %s42
    %p48 = scmp.eq.s32.totalorder %s8, 0
    %p49 = por %p47, %p48
    %p50 = scmp.ne.s32.totalorder %s39, %s42
    %p51 = scmp.eq.s32.totalorder %s13, 1
    %p52 = por %p50, %p51
    %p53 = scmp.ne.s32.totalorder %s42, %s43
    %p54 = scmp.eq.s32.totalorder %s13, 0
    %p55 = por %p53, %p54
    %p56 = scmp.ne.s32.totalorder %s42, %s43
    %p57 = scmp.eq.s32.totalorder %s14, 1
    %p58 = por %p56, %p57
    %p60 = scmp.ne.s32.totalorder %s43, %s59
    %p61 = scmp.eq.s32.totalorder %s14, 0
    %p62 = por %p60, %p61
    %s63 = ssub.s32 %s8, %s15
    %p64 = scmp.eq.s32.totalorder %s63, 0
    %s66 = sadd.s32 %s65, 1
    %s67 = scalar_select %p64, %s65, %s66
    %p70 = pneg %p64
    %p71 = scmp.eq.s32.totalorder %s8, 1
    %p72 = por %p70, %p71
    %p73 = scmp.ne.s32.totalorder %s65, %s68
    %p74 = scmp.eq.s32.totalorder %s8, 0
    %p75 = por %p73, %p74
    %p76 = scmp.ne.s32.totalorder %s65, %s68
    %p77 = scmp.eq.s32.totalorder %s13, 1
    %p78 = por %p76, %p77
    %p79 = scmp.ne.s32.totalorder %s68, %s69
    %p80 = scmp.eq.s32.totalorder %s13, 0
    %p81 = por %p79, %p80
    %p82 = scmp.ne.s32.totalorder %s68, %s69
    %p83 = scmp.eq.s32.totalorder %s14, 1
    %p84 = por %p82, %p83
    %p86 = scmp.ne.s32.totalorder %s69, %s85
    %p87 = scmp.eq.s32.totalorder %s14, 0
    %p88 = por %p86, %p87
    %p89 = scmp.le.s32.totalorder 1, %s8
    %p90 = scmp.lt.s32.totalorder %s8, 3
    %p91 = pnand %p89, %p90
    %p92 = pneg %p91
    // Predicated region
    $region9: #{tpu_custom_call.1} parent=5 // pred_check
      _
    $region10: #{tpu_custom_call.1} parent=5 // pred_check_branch
      %94 = sbr.rel (%p91) target = $region12
    $region11: #{tpu_custom_call.1} parent=5 // pred_region
      %s95 = ssub.s32 %s8, 1
      // Predicated region
      $region13: #{tpu_custom_call.1} parent=11 // pred_check
        %p96 = pneg %p29
      $region14: #{tpu_custom_call.1} parent=11 // pred_check_branch
        %98 = sbr.rel (%p96) target = $region16
      $region15: #{tpu_custom_call.1} parent=11 // pred_region
        _
      $region16: #{tpu_custom_call.1} parent=11 // pred_fallthru
        _
    $region12: #{tpu_custom_call.1} parent=5 // pred_fallthru
      _
    %p99 = scmp.lt.s32.totalorder %s8, 2
    // Predicated region
    $region17: #{tpu_custom_call.1} parent=5 // pred_check
      %p100 = pneg %p99
    $region18: #{tpu_custom_call.1} parent=5 // pred_check_branch
      %102 = sbr.rel (%p100) target = $region20
    $region19: #{tpu_custom_call.1} parent=5 // pred_region
      // Predicated region
      $region21: #{tpu_custom_call.1} parent=19 // pred_check
        %p103 = pneg %p49
      $region22: #{tpu_custom_call.1} parent=19 // pred_check_branch
        %105 = sbr.rel (%p103) target = $region24
      $region23: #{tpu_custom_call.1} parent=19 // pred_region
        %p106 = scmp.lt.s32.totalorder %s8, 1
        %s107 = scalar_select %p106, %s8, 1
        %s108 = smul.addr %s107, 3
        %s109 = smul.addr %s108, 4
        %s110 = scalar_lea.vmem %s1, %s109
      $region24: #{tpu_custom_call.1} parent=19 // pred_fallthru
        _
    $region20: #{tpu_custom_call.1} parent=5 // pred_fallthru
      _
    %p111 = scmp.le.s32.totalorder 1, %s8
    %p112 = scmp.lt.s32.totalorder %s8, 3
    %p113 = pnand %p111, %p112
    %p114 = pneg %p113
    // Predicated region
    $region25: #{tpu_custom_call.1} parent=5 // pred_check
      _
    $region26: #{tpu_custom_call.1} parent=5 // pred_check_branch
      %116 = sbr.rel (%p113) target = $region28
    $region27: #{tpu_custom_call.1} parent=5 // pred_region
      %s117 = ssub.s32 %s8, 1
      %p118 = pneg %p29
      %p119 = pneg %p26
      %p120 = scmp.lt.s32.totalorder %s13, 1
      %s121 = scalar_select %p120, %s13, 1
      %s122 = smul.addr %s121, 3
      %s123 = smul.addr %s122, 4
      %s124 = scalar_lea.vmem %s1, %s123
      %p125 = pneg %p55
      %p126 = pneg %p52
      %p127 = pneg %p81
      %p128 = pneg %p78
      %p129 = scmp.lt.s32.totalorder %s13, 1
      %s130 = scalar_select %p129, %s13, 1
      %s131 = smul.addr %s130, 2
      %s132 = smul.addr %s131, 4
      %s133 = scalar_lea.vmem %s2, %s132
      %p134 = scmp.lt.s32.totalorder %s13, 1
      %s135 = scalar_select %p134, %s13, 1
      %s136 = smul.addr %s135, 3
      %s137 = smul.addr %s136, 4
      %s138 = scalar_lea.vmem %s1, %s137
      %p139 = scmp.lt.s32.totalorder %s13, 1
      %s140 = scalar_select %p139, %s13, 1
      %s141 = smul.addr %s140, 2
      %s142 = smul.addr %s141, 4
      %s143 = scalar_lea.vmem %s2, %s142
      %v144 = vlaneseq
      %v145 = vand.u32 %v144, 127
      %v146 = vadd.s32 %v145, 128
      %vm147 = vcmp.lt.s32.totalorder %v145, 0
      %v148 = vsub.s32 0, %v145
      %v149 = vsel %vm147, %v148, %v145
      %v150 = vshrl.u32 %v149, 4
      %v151 = vand.u32 %v149, 15
      %v152 = vsub.s32 0, %v151
      %v153 = vsel %vm147, %v152, %v151
      %vm154 = vcmp.lt.s32.totalorder %v146, 0
      %v155 = vsub.s32 0, %v146
      %v156 = vsel %vm154, %v155, %v146
      %v157 = vshrl.u32 %v156, 4
      %v158 = vand.u32 %v156, 15
      %v159 = vsub.s32 0, %v158
      %v160 = vsel %vm154, %v159, %v158
      %vm161 = vcmp.ne.s32.totalorder %v153, 0
      %vm162 = vcmp.ne.s32.totalorder %v160, 0
      %vm163 = vcmp.lt.s32.totalorder %v153, 0
      %vm164 = vcmp.lt.s32.totalorder %v160, 0
      %vm165 = vmand %vm163, %vm161
      %vm166 = vmand %vm164, %vm162
      %v167 = vadd.s32 %v153, 16
      %v168 = vadd.s32 %v160, 16
      %v169 = vsel %vm165, %v167, %v153
      %v170 = vsel %vm166, %v168, %v160
      %vm171 = vcmp.ne.s32.totalorder %v169, 0
      %vm172 = vcmp.ne.s32.totalorder %v170, 0
      %v173 = vsel %vm171, 1, 0
      %v174 = vsel %vm172, 1, 0
      %v175 = vcvt.s32.f32 %v173
      %v176 = vcvt.s32.f32 %v174
      %vm177 = vcmp.ne.s32.totalorder %v169, 15
      %vm178 = vcmp.ne.s32.totalorder %v170, 15
      %v179 = vsel %vm177, 1, 0
      %v180 = vsel %vm178, 1, 0
      %v181 = vcvt.s32.f32 %v179
      %v182 = vcvt.s32.f32 %v180
      %v183 = vld [vmem:[%s138] sm:$0xff]
      %v184 = vld [vmem:[%s0] sm:$0xff]
      %v186 = vcombine.high %v183, %v183
      %vm187 = vcmask 31744
      %v189 = vsel %vm187, %v184, 0
      %vm191 = vcmask 1043456
      %v192 = vsel %vm191, %v183, 0
      %v194 = vsel %vm191, %v186, 0
      %196 = vmatprep.subr.mxu0 %v194
      %197 = vmatpush1.msra.mxu0 %v192
      %198 = vmatprep.subr.mxu0 0.0
      %199 = vmatpush1.msra.mxu0 0.0
      %200 = vmatprep.subr.mxu0 0.0
      %201 = vmatpush1.msra.mxu0 0.0
      %202 = vmatprep.subr.mxu0 0.0
      %203 = vmatpush1.msra.mxu0 0.0
      %204 = vmatprep.subr.mxu0 0.0
      %205 = vmatpush1.msra.mxu0 0.0
      %206 = vmatprep.subr.mxu0 0.0
      %207 = vmatpush1.msra.mxu0 0.0
      %208 = vmatprep.subr.mxu0 0.0
      %209 = vmatpush1.msra.mxu0 0.0
      %210 = vmatprep.subr.mxu0 0.0
      %211 = vmatpush1.msra.mxu0 0.0
      %212 = vmatprep.subr.mxu0 0.0
      %213 = vmatpush1.msra.mxu0 0.0
      %214 = vmatprep.subr.mxu0 0.0
      %215 = vmatpush1.msra.mxu0 0.0
      %216 = vmatprep.subr.mxu0 0.0
      %217 = vmatpush1.msra.mxu0 0.0
      %218 = vmatprep.subr.mxu0 0.0
      %219 = vmatpush1.msra.mxu0 0.0
      %220 = vmatprep.subr.mxu0 0.0
      %221 = vmatpush1.msra.mxu0 0.0
      %222 = vmatprep.subr.mxu0 0.0
      %223 = vmatpush1.msra.mxu0 0.0
      %224 = vmatprep.subr.mxu0 0.0
      %225 = vmatpush1.msra.mxu0 0.0
      %226 = vmatprep.subr.mxu0 0.0
      %227 = vmatpush1.msra.mxu0 0.0
      %228 = vmatprep.subr.mxu0 0.0
      %229 = vmatpush1.msra.mxu0 0.0
      %230 = vmatprep.subr.mxu0 0.0
      %231 = vmatpush1.msra.mxu0 0.0
      %232 = vmatprep.subr.mxu0 0.0
      %233 = vmatpush1.msra.mxu0 0.0
      %234 = vmatprep.subr.mxu0 0.0
      %235 = vmatpush1.msra.mxu0 0.0
      %236 = vmatprep.subr.mxu0 0.0
      %237 = vmatpush1.msra.mxu0 0.0
      %238 = vmatprep.subr.mxu0 0.0
      %239 = vmatpush1.msra.mxu0 0.0
      %240 = vmatprep.subr.mxu0 0.0
      %241 = vmatpush1.msra.mxu0 0.0
      %242 = vmatprep.subr.mxu0 0.0
      %243 = vmatpush1.msra.mxu0 0.0
      %244 = vmatprep.subr.mxu0 0.0
      %245 = vmatpush1.msra.mxu0 0.0
      %246 = vmatprep.subr.mxu0 0.0
      %247 = vmatpush1.msra.mxu0 0.0
      %248 = vmatprep.subr.mxu0 0.0
      %249 = vmatpush1.msra.mxu0 0.0
      %250 = vmatprep.subr.mxu0 0.0
      %251 = vmatpush1.msra.mxu0 0.0
      %252 = vmatprep.subr.mxu0 0.0
      %253 = vmatpush1.msra.mxu0 0.0
      %254 = vmatprep.subr.mxu0 0.0
      %255 = vmatpush1.msra.mxu0 0.0
      %256 = vmatprep.subr.mxu0 0.0
      %257 = vmatpush1.msra.mxu0 0.0
      %258 = vmatprep.subr.mxu0 0.0
      %259 = vmatpush1.msra.mxu0 0.0
      %260 = vmatprep.mubr.f32.mxu0 0.0
      %261 = vmatmul.mubr.f32.gmra.mrb[0].mxu0 %v189
      %v262 = vpop.f32.mrb[0].mxu0
      %v263 = vadd.f32 0.0, %v262
      %v264 = vpop.f32.mrb[0].mxu0
      %v265 = vadd.f32 0.0, %v264
      %266 = vdwg.mxu0
      %v267 = vmul.f32 %v263, %v175
      %v268 = vmul.f32 %v265, %v176
      %v269 = vadd.f32 %v267, 0.0
      %v270 = vadd.f32 %v268, 0.0
      %v271 = vld [vmem:[%s138] sm:$0xff]
      %v272 = vld [vmem:[%s138 + $0x8] sm:$0xf]
      %s273 = scalar_lea.vmem %s0, 8
      %v274 = vld [vmem:[%s273] sm:$0xff]
      %v277 = vcombine.high %v271, %v271
      %278 = vrot.lane.b32.xlu0 %v271, 127
      %v279 = vpop.permute.xlu0 %278
      %280 = vrot.lane.b32.xlu0 %v277, 127
      %v281 = vpop.permute.xlu0 %280
      %282 = vrot.lane.b32.xlu0 %v272, 127
      %v283 = vpop.permute.xlu0 %282
      %vm284 = vcmask 1039360
      %v285 = vsel %vm284, %v279, %v281
      %v286 = vsel %vm284, %v281, %v283
      %v288 = vsel %vm187, %v274, 0
      %v290 = vsel %vm191, %v285, 0
      %v292 = vsel %vm191, %v286, 0
      %294 = vmatprep.subr.mxu0 %v292
      %295 = vmatpush1.msra.mxu0 %v290
      %296 = vmatprep.subr.mxu0 0.0
      %297 = vmatpush1.msra.mxu0 0.0
      %298 = vmatprep.subr.mxu0 0.0
      %299 = vmatpush1.msra.mxu0 0.0
      %300 = vmatprep.subr.mxu0 0.0
      %301 = vmatpush1.msra.mxu0 0.0
      %302 = vmatprep.subr.mxu0 0.0
      %303 = vmatpush1.msra.mxu0 0.0
      %304 = vmatprep.subr.mxu0 0.0
      %305 = vmatpush1.msra.mxu0 0.0
      %306 = vmatprep.subr.mxu0 0.0
      %307 = vmatpush1.msra.mxu0 0.0
      %308 = vmatprep.subr.mxu0 0.0
      %309 = vmatpush1.msra.mxu0 0.0
      %310 = vmatprep.subr.mxu0 0.0
      %311 = vmatpush1.msra.mxu0 0.0
      %312 = vmatprep.subr.mxu0 0.0
      %313 = vmatpush1.msra.mxu0 0.0
      %314 = vmatprep.subr.mxu0 0.0
      %315 = vmatpush1.msra.mxu0 0.0
      %316 = vmatprep.subr.mxu0 0.0
      %317 = vmatpush1.msra.mxu0 0.0
      %318 = vmatprep.subr.mxu0 0.0
      %319 = vmatpush1.msra.mxu0 0.0
      %320 = vmatprep.subr.mxu0 0.0
      %321 = vmatpush1.msra.mxu0 0.0
      %322 = vmatprep.subr.mxu0 0.0
      %323 = vmatpush1.msra.mxu0 0.0
      %324 = vmatprep.subr.mxu0 0.0
      %325 = vmatpush1.msra.mxu0 0.0
      %326 = vmatprep.subr.mxu0 0.0
      %327 = vmatpush1.msra.mxu0 0.0
      %328 = vmatprep.subr.mxu0 0.0
      %329 = vmatpush1.msra.mxu0 0.0
      %330 = vmatprep.subr.mxu0 0.0
      %331 = vmatpush1.msra.mxu0 0.0
      %332 = vmatprep.subr.mxu0 0.0
      %333 = vmatpush1.msra.mxu0 0.0
      %334 = vmatprep.subr.mxu0 0.0
      %335 = vmatpush1.msra.mxu0 0.0
      %336 = vmatprep.subr.mxu0 0.0
      %337 = vmatpush1.msra.mxu0 0.0
      %338 = vmatprep.subr.mxu0 0.0
      %339 = vmatpush1.msra.mxu0 0.0
      %340 = vmatprep.subr.mxu0 0.0
      %341 = vmatpush1.msra.mxu0 0.0
      %342 = vmatprep.subr.mxu0 0.0
      %343 = vmatpush1.msra.mxu0 0.0
      %344 = vmatprep.subr.mxu0 0.0
      %345 = vmatpush1.msra.mxu0 0.0
      %346 = vmatprep.subr.mxu0 0.0
      %347 = vmatpush1.msra.mxu0 0.0
      %348 = vmatprep.subr.mxu0 0.0
      %349 = vmatpush1.msra.mxu0 0.0
      %350 = vmatprep.subr.mxu0 0.0
      %351 = vmatpush1.msra.mxu0 0.0
      %352 = vmatprep.subr.mxu0 0.0
      %353 = vmatpush1.msra.mxu0 0.0
      %354 = vmatprep.subr.mxu0 0.0
      %355 = vmatpush1.msra.mxu0 0.0
      %356 = vmatprep.subr.mxu0 0.0
      %357 = vmatpush1.msra.mxu0 0.0
      %358 = vmatprep.mubr.f32.mxu0 0.0
      %359 = vmatmul.mubr.f32.gmra.mrb[0].mxu0 %v288
      %v360 = vpop.f32.mrb[0].mxu0
      %v361 = vadd.f32 0.0, %v360
      %v362 = vpop.f32.mrb[0].mxu0
      %v363 = vadd.f32 0.0, %v362
      %364 = vdwg.mxu0
      %v365 = vadd.f32 %v269, %v361
      %v366 = vadd.f32 %v270, %v363
      %v367 = vld [vmem:[%s138] sm:$0xff]
      %v368 = vld [vmem:[%s138 + $0x8] sm:$0xf]
      %s369 = scalar_lea.vmem %s0, 16
      %v370 = vld [vmem:[%s369] sm:$0xff]
      %v373 = vcombine.high %v367, %v367
      %374 = vrot.lane.b32.xlu0 %v367, 126
      %v375 = vpop.permute.xlu0 %374
      %376 = vrot.lane.b32.xlu0 %v373, 126
      %v377 = vpop.permute.xlu0 %376
      %378 = vrot.lane.b32.xlu0 %v368, 126
      %v379 = vpop.permute.xlu0 %378
      %vm380 = vcmask 1031168
      %v381 = vsel %vm380, %v375, %v377
      %v382 = vsel %vm380, %v377, %v379
      %v384 = vsel %vm187, %v370, 0
      %v386 = vsel %vm191, %v381, 0
      %v388 = vsel %vm191, %v382, 0
      %390 = vmatprep.subr.mxu0 %v388
      %391 = vmatpush1.msra.mxu0 %v386
      %392 = vmatprep.subr.mxu0 0.0
      %393 = vmatpush1.msra.mxu0 0.0
      %394 = vmatprep.subr.mxu0 0.0
      %395 = vmatpush1.msra.mxu0 0.0
      %396 = vmatprep.subr.mxu0 0.0
      %397 = vmatpush1.msra.mxu0 0.0
      %398 = vmatprep.subr.mxu0 0.0
      %399 = vmatpush1.msra.mxu0 0.0
      %400 = vmatprep.subr.mxu0 0.0
      %401 = vmatpush1.msra.mxu0 0.0
      %402 = vmatprep.subr.mxu0 0.0
      %403 = vmatpush1.msra.mxu0 0.0
      %404 = vmatprep.subr.mxu0 0.0
      %405 = vmatpush1.msra.mxu0 0.0
      %406 = vmatprep.subr.mxu0 0.0
      %407 = vmatpush1.msra.mxu0 0.0
      %408 = vmatprep.subr.mxu0 0.0
      %409 = vmatpush1.msra.mxu0 0.0
      %410 = vmatprep.subr.mxu0 0.0
      %411 = vmatpush1.msra.mxu0 0.0
      %412 = vmatprep.subr.mxu0 0.0
      %413 = vmatpush1.msra.mxu0 0.0
      %414 = vmatprep.subr.mxu0 0.0
      %415 = vmatpush1.msra.mxu0 0.0
      %416 = vmatprep.subr.mxu0 0.0
      %417 = vmatpush1.msra.mxu0 0.0
      %418 = vmatprep.subr.mxu0 0.0
      %419 = vmatpush1.msra.mxu0 0.0
      %420 = vmatprep.subr.mxu0 0.0
      %421 = vmatpush1.msra.mxu0 0.0
      %422 = vmatprep.subr.mxu0 0.0
      %423 = vmatpush1.msra.mxu0 0.0
      %424 = vmatprep.subr.mxu0 0.0
      %425 = vmatpush1.msra.mxu0 0.0
      %426 = vmatprep.subr.mxu0 0.0
      %427 = vmatpush1.msra.mxu0 0.0
      %428 = vmatprep.subr.mxu0 0.0
      %429 = vmatpush1.msra.mxu0 0.0
      %430 = vmatprep.subr.mxu0 0.0
      %431 = vmatpush1.msra.mxu0 0.0
      %432 = vmatprep.subr.mxu0 0.0
      %433 = vmatpush1.msra.mxu0 0.0
      %434 = vmatprep.subr.mxu0 0.0
      %435 = vmatpush1.msra.mxu0 0.0
      %436 = vmatprep.subr.mxu0 0.0
      %437 = vmatpush1.msra.mxu0 0.0
      %438 = vmatprep.subr.mxu0 0.0
      %439 = vmatpush1.msra.mxu0 0.0
      %440 = vmatprep.subr.mxu0 0.0
      %441 = vmatpush1.msra.mxu0 0.0
      %442 = vmatprep.subr.mxu0 0.0
      %443 = vmatpush1.msra.mxu0 0.0
      %444 = vmatprep.subr.mxu0 0.0
      %445 = vmatpush1.msra.mxu0 0.0
      %446 = vmatprep.subr.mxu0 0.0
      %447 = vmatpush1.msra.mxu0 0.0
      %448 = vmatprep.subr.mxu0 0.0
      %449 = vmatpush1.msra.mxu0 0.0
      %450 = vmatprep.subr.mxu0 0.0
      %451 = vmatpush1.msra.mxu0 0.0
      %452 = vmatprep.subr.mxu0 0.0
      %453 = vmatpush1.msra.mxu0 0.0
      %454 = vmatprep.mubr.f32.mxu0 0.0
      %455 = vmatmul.mubr.f32.gmra.mrb[0].mxu0 %v384
      %v456 = vpop.f32.mrb[0].mxu0
      %v457 = vadd.f32 0.0, %v456
      %v458 = vpop.f32.mrb[0].mxu0
      %v459 = vadd.f32 0.0, %v458
      %460 = vdwg.mxu0
      %v461 = vmul.f32 %v457, %v181
      %v462 = vmul.f32 %v459, %v182
      %v463 = vadd.f32 %v365, %v461
      %v464 = vadd.f32 %v366, %v462
      %v465 = vld [vmem:[%s138] sm:$0xff]
      %v466 = vld [vmem:[%s138 + $0x8] sm:$0xf]
      %s467 = scalar_lea.vmem %s0, 24
      %v468 = vld [vmem:[%s467] sm:$0xff]
      %v471 = vcombine.high %v465, %v465
      %472 = vrot.lane.b32.xlu0 %v465, 112
      %v473 = vpop.permute.xlu0 %472
      %474 = vrot.lane.b32.xlu0 %v471, 112
      %v475 = vpop.permute.xlu0 %474
      %476 = vrot.lane.b32.xlu0 %v466, 112
      %v477 = vpop.permute.xlu0 %476
      %vm478 = vcmask 916480
      %v479 = vsel %vm478, %v473, %v475
      %v480 = vsel %vm478, %v475, %v477
      %v482 = vsel %vm187, %v468, 0
      %v484 = vsel %vm191, %v479, 0
      %v486 = vsel %vm191, %v480, 0
      %488 = vmatprep.subr.mxu0 %v486
      %489 = vmatpush1.msra.mxu0 %v484
      %490 = vmatprep.subr.mxu0 0.0
      %491 = vmatpush1.msra.mxu0 0.0
      %492 = vmatprep.subr.mxu0 0.0
      %493 = vmatpush1.msra.mxu0 0.0
      %494 = vmatprep.subr.mxu0 0.0
      %495 = vmatpush1.msra.mxu0 0.0
      %496 = vmatprep.subr.mxu0 0.0
      %497 = vmatpush1.msra.mxu0 0.0
      %498 = vmatprep.subr.mxu0 0.0
      %499 = vmatpush1.msra.mxu0 0.0
      %500 = vmatprep.subr.mxu0 0.0
      %501 = vmatpush1.msra.mxu0 0.0
      %502 = vmatprep.subr.mxu0 0.0
      %503 = vmatpush1.msra.mxu0 0.0
      %504 = vmatprep.subr.mxu0 0.0
      %505 = vmatpush1.msra.mxu0 0.0
      %506 = vmatprep.subr.mxu0 0.0
      %507 = vmatpush1.msra.mxu0 0.0
      %508 = vmatprep.subr.mxu0 0.0
      %509 = vmatpush1.msra.mxu0 0.0
      %510 = vmatprep.subr.mxu0 0.0
      %511 = vmatpush1.msra.mxu0 0.0
      %512 = vmatprep.subr.mxu0 0.0
      %513 = vmatpush1.msra.mxu0 0.0
      %514 = vmatprep.subr.mxu0 0.0
      %515 = vmatpush1.msra.mxu0 0.0
      %516 = vmatprep.subr.mxu0 0.0
      %517 = vmatpush1.msra.mxu0 0.0
      %518 = vmatprep.subr.mxu0 0.0
      %519 = vmatpush1.msra.mxu0 0.0
      %520 = vmatprep.subr.mxu0 0.0
      %521 = vmatpush1.msra.mxu0 0.0
      %522 = vmatprep.subr.mxu0 0.0
      %523 = vmatpush1.msra.mxu0 0.0
      %524 = vmatprep.subr.mxu0 0.0
      %525 = vmatpush1.msra.mxu0 0.0
      %526 = vmatprep.subr.mxu0 0.0
      %527 = vmatpush1.msra.mxu0 0.0
      %528 = vmatprep.subr.mxu0 0.0
      %529 = vmatpush1.msra.mxu0 0.0
      %530 = vmatprep.subr.mxu0 0.0
      %531 = vmatpush1.msra.mxu0 0.0
      %532 = vmatprep.subr.mxu0 0.0
      %533 = vmatpush1.msra.mxu0 0.0
      %534 = vmatprep.subr.mxu0 0.0
      %535 = vmatpush1.msra.mxu0 0.0
      %536 = vmatprep.subr.mxu0 0.0
      %537 = vmatpush1.msra.mxu0 0.0
      %538 = vmatprep.subr.mxu0 0.0
      %539 = vmatpush1.msra.mxu0 0.0
      %540 = vmatprep.subr.mxu0 0.0
      %541 = vmatpush1.msra.mxu0 0.0
      %542 = vmatprep.subr.mxu0 0.0
      %543 = vmatpush1.msra.mxu0 0.0
      %544 = vmatprep.subr.mxu0 0.0
      %545 = vmatpush1.msra.mxu0 0.0
      %546 = vmatprep.subr.mxu0 0.0
      %547 = vmatpush1.msra.mxu0 0.0
      %548 = vmatprep.subr.mxu0 0.0
      %549 = vmatpush1.msra.mxu0 0.0
      %550 = vmatprep.subr.mxu0 0.0
      %551 = vmatpush1.msra.mxu0 0.0
      %552 = vmatprep.mubr.f32.mxu0 0.0
      %553 = vmatmul.mubr.f32.gmra.mrb[0].mxu0 %v482
      %v554 = vpop.f32.mrb[0].mxu0
      %v555 = vadd.f32 0.0, %v554
      %v556 = vpop.f32.mrb[0].mxu0
      %v557 = vadd.f32 0.0, %v556
      %558 = vdwg.mxu0
      %v559 = vmul.f32 %v555, %v175
      %v560 = vmul.f32 %v557, %v176
      %v561 = vadd.f32 %v463, %v559
      %v562 = vadd.f32 %v464, %v560
      %v563 = vld [vmem:[%s138] sm:$0xff]
      %v564 = vld [vmem:[%s138 + $0x8] sm:$0xf]
      %s565 = scalar_lea.vmem %s0, 32
      %v566 = vld [vmem:[%s565] sm:$0xff]
      %v569 = vcombine.high %v563, %v563
      %570 = vrot.lane.b32.xlu0 %v563, 111
      %v571 = vpop.permute.xlu0 %570
      %572 = vrot.lane.b32.xlu0 %v569, 111
      %v573 = vpop.permute.xlu0 %572
      %574 = vrot.lane.b32.xlu0 %v564, 111
      %v575 = vpop.permute.xlu0 %574
      %vm576 = vcmask 908288
      %v577 = vsel %vm576, %v571, %v573
      %v578 = vsel %vm576, %v573, %v575
      %v580 = vsel %vm187, %v566, 0
      %v582 = vsel %vm191, %v577, 0
      %v584 = vsel %vm191, %v578, 0
      %586 = vmatprep.subr.mxu0 %v584
      %587 = vmatpush1.msra.mxu0 %v582
      %588 = vmatprep.subr.mxu0 0.0
      %589 = vmatpush1.msra.mxu0 0.0
      %590 = vmatprep.subr.mxu0 0.0
      %591 = vmatpush1.msra.mxu0 0.0
      %592 = vmatprep.subr.mxu0 0.0
      %593 = vmatpush1.msra.mxu0 0.0
      %594 = vmatprep.subr.mxu0 0.0
      %595 = vmatpush1.msra.mxu0 0.0
      %596 = vmatprep.subr.mxu0 0.0
      %597 = vmatpush1.msra.mxu0 0.0
      %598 = vmatprep.subr.mxu0 0.0
      %599 = vmatpush1.msra.mxu0 0.0
      %600 = vmatprep.subr.mxu0 0.0
      %601 = vmatpush1.msra.mxu0 0.0
      %602 = vmatprep.subr.mxu0 0.0
      %603 = vmatpush1.msra.mxu0 0.0
      %604 = vmatprep.subr.mxu0 0.0
      %605 = vmatpush1.msra.mxu0 0.0
      %606 = vmatprep.subr.mxu0 0.0
      %607 = vmatpush1.msra.mxu0 0.0
      %608 = vmatprep.subr.mxu0 0.0
      %609 = vmatpush1.msra.mxu0 0.0
      %610 = vmatprep.subr.mxu0 0.0
      %611 = vmatpush1.msra.mxu0 0.0
      %612 = vmatprep.subr.mxu0 0.0
      %613 = vmatpush1.msra.mxu0 0.0
      %614 = vmatprep.subr.mxu0 0.0
      %615 = vmatpush1.msra.mxu0 0.0
      %616 = vmatprep.subr.mxu0 0.0
      %617 = vmatpush1.msra.mxu0 0.0
      %618 = vmatprep.subr.mxu0 0.0
      %619 = vmatpush1.msra.mxu0 0.0
      %620 = vmatprep.subr.mxu0 0.0
      %621 = vmatpush1.msra.mxu0 0.0
      %622 = vmatprep.subr.mxu0 0.0
      %623 = vmatpush1.msra.mxu0 0.0
      %624 = vmatprep.subr.mxu0 0.0
      %625 = vmatpush1.msra.mxu0 0.0
      %626 = vmatprep.subr.mxu0 0.0
      %627 = vmatpush1.msra.mxu0 0.0
      %628 = vmatprep.subr.mxu0 0.0
      %629 = vmatpush1.msra.mxu0 0.0
      %630 = vmatprep.subr.mxu0 0.0
      %631 = vmatpush1.msra.mxu0 0.0
      %632 = vmatprep.subr.mxu0 0.0
      %633 = vmatpush1.msra.mxu0 0.0
      %634 = vmatprep.subr.mxu0 0.0
      %635 = vmatpush1.msra.mxu0 0.0
      %636 = vmatprep.subr.mxu0 0.0
      %637 = vmatpush1.msra.mxu0 0.0
      %638 = vmatprep.subr.mxu0 0.0
      %639 = vmatpush1.msra.mxu0 0.0
      %640 = vmatprep.subr.mxu0 0.0
      %641 = vmatpush1.msra.mxu0 0.0
      %642 = vmatprep.subr.mxu0 0.0
      %643 = vmatpush1.msra.mxu0 0.0
      %644 = vmatprep.subr.mxu0 0.0
      %645 = vmatpush1.msra.mxu0 0.0
      %646 = vmatprep.subr.mxu0 0.0
      %647 = vmatpush1.msra.mxu0 0.0
      %648 = vmatprep.subr.mxu0 0.0
      %649 = vmatpush1.msra.mxu0 0.0
      %650 = vmatprep.mubr.f32.mxu0 0.0
      %651 = vmatmul.mubr.f32.gmra.mrb[0].mxu0 %v580
      %v652 = vpop.f32.mrb[0].mxu0
      %v653 = vadd.f32 0.0, %v652
      %v654 = vpop.f32.mrb[0].mxu0
      %v655 = vadd.f32 0.0, %v654
      %656 = vdwg.mxu0
      %v657 = vadd.f32 %v561, %v653
      %v658 = vadd.f32 %v562, %v655
      %v659 = vld [vmem:[%s138] sm:$0xff]
      %v660 = vld [vmem:[%s138 + $0x8] sm:$0xf]
      %s661 = scalar_lea.vmem %s0, 40
      %v662 = vld [vmem:[%s661] sm:$0xff]
      %v665 = vcombine.high %v659, %v659
      %666 = vrot.lane.b32.xlu0 %v659, 110
      %v667 = vpop.permute.xlu0 %666
      %668 = vrot.lane.b32.xlu0 %v665, 110
      %v669 = vpop.permute.xlu0 %668
      %670 = vrot.lane.b32.xlu0 %v660, 110
      %v671 = vpop.permute.xlu0 %670
      %vm672 = vcmask 900096
      %v673 = vsel %vm672, %v667, %v669
      %v674 = vsel %vm672, %v669, %v671
      %v676 = vsel %vm187, %v662, 0
      %v678 = vsel %vm191, %v673, 0
      %v680 = vsel %vm191, %v674, 0
      %682 = vmatprep.subr.mxu0 %v680
      %683 = vmatpush1.msra.mxu0 %v678
      %684 = vmatprep.subr.mxu0 0.0
      %685 = vmatpush1.msra.mxu0 0.0
      %686 = vmatprep.subr.mxu0 0.0
      %687 = vmatpush1.msra.mxu0 0.0
      %688 = vmatprep.subr.mxu0 0.0
      %689 = vmatpush1.msra.mxu0 0.0
      %690 = vmatprep.subr.mxu0 0.0
      %691 = vmatpush1.msra.mxu0 0.0
      %692 = vmatprep.subr.mxu0 0.0
      %693 = vmatpush1.msra.mxu0 0.0
      %694 = vmatprep.subr.mxu0 0.0
      %695 = vmatpush1.msra.mxu0 0.0
      %696 = vmatprep.subr.mxu0 0.0
      %697 = vmatpush1.msra.mxu0 0.0
      %698 = vmatprep.subr.mxu0 0.0
      %699 = vmatpush1.msra.mxu0 0.0
      %700 = vmatprep.subr.mxu0 0.0
      %701 = vmatpush1.msra.mxu0 0.0
      %702 = vmatprep.subr.mxu0 0.0
      %703 = vmatpush1.msra.mxu0 0.0
      %704 = vmatprep.subr.mxu0 0.0
      %705 = vmatpush1.msra.mxu0 0.0
      %706 = vmatprep.subr.mxu0 0.0
      %707 = vmatpush1.msra.mxu0 0.0
      %708 = vmatprep.subr.mxu0 0.0
      %709 = vmatpush1.msra.mxu0 0.0
      %710 = vmatprep.subr.mxu0 0.0
      %711 = vmatpush1.msra.mxu0 0.0
      %712 = vmatprep.subr.mxu0 0.0
      %713 = vmatpush1.msra.mxu0 0.0
      %714 = vmatprep.subr.mxu0 0.0
      %715 = vmatpush1.msra.mxu0 0.0
      %716 = vmatprep.subr.mxu0 0.0
      %717 = vmatpush1.msra.mxu0 0.0
      %718 = vmatprep.subr.mxu0 0.0
      %719 = vmatpush1.msra.mxu0 0.0
      %720 = vmatprep.subr.mxu0 0.0
      %721 = vmatpush1.msra.mxu0 0.0
      %722 = vmatprep.subr.mxu0 0.0
      %723 = vmatpush1.msra.mxu0 0.0
      %724 = vmatprep.subr.mxu0 0.0
      %725 = vmatpush1.msra.mxu0 0.0
      %726 = vmatprep.subr.mxu0 0.0
      %727 = vmatpush1.msra.mxu0 0.0
      %728 = vmatprep.subr.mxu0 0.0
      %729 = vmatpush1.msra.mxu0 0.0
      %730 = vmatprep.subr.mxu0 0.0
      %731 = vmatpush1.msra.mxu0 0.0
      %732 = vmatprep.subr.mxu0 0.0
      %733 = vmatpush1.msra.mxu0 0.0
      %734 = vmatprep.subr.mxu0 0.0
      %735 = vmatpush1.msra.mxu0 0.0
      %736 = vmatprep.subr.mxu0 0.0
      %737 = vmatpush1.msra.mxu0 0.0
      %738 = vmatprep.subr.mxu0 0.0
      %739 = vmatpush1.msra.mxu0 0.0
      %740 = vmatprep.subr.mxu0 0.0
      %741 = vmatpush1.msra.mxu0 0.0
      %742 = vmatprep.subr.mxu0 0.0
      %743 = vmatpush1.msra.mxu0 0.0
      %744 = vmatprep.subr.mxu0 0.0
      %745 = vmatpush1.msra.mxu0 0.0
      %746 = vmatprep.mubr.f32.mxu0 0.0
      %747 = vmatmul.mubr.f32.gmra.mrb[0].mxu0 %v676
      %v748 = vpop.f32.mrb[0].mxu0
      %v749 = vadd.f32 0.0, %v748
      %v750 = vpop.f32.mrb[0].mxu0
      %v751 = vadd.f32 0.0, %v750
      %752 = vdwg.mxu0
      %v753 = vmul.f32 %v749, %v181
      %v754 = vmul.f32 %v751, %v182
      %v755 = vadd.f32 %v657, %v753
      %v756 = vadd.f32 %v658, %v754
      %v757 = vld [vmem:[%s138] sm:$0xff]
      %v758 = vld [vmem:[%s138 + $0x8] sm:$0xf]
      %s759 = scalar_lea.vmem %s0, 48
      %v760 = vld [vmem:[%s759] sm:$0xff]
      %v763 = vcombine.high %v757, %v757
      %764 = vrot.lane.b32.xlu0 %v757, 96
      %v765 = vpop.permute.xlu0 %764
      %766 = vrot.lane.b32.xlu0 %v763, 96
      %v767 = vpop.permute.xlu0 %766
      %768 = vrot.lane.b32.xlu0 %v758, 96
      %v769 = vpop.permute.xlu0 %768
      %vm770 = vcmask 785408
      %v771 = vsel %vm770, %v765, %v767
      %v772 = vsel %vm770, %v767, %v769
      %v774 = vsel %vm187, %v760, 0
      %v776 = vsel %vm191, %v771, 0
      %v778 = vsel %vm191, %v772, 0
      %780 = vmatprep.subr.mxu0 %v778
      %781 = vmatpush1.msra.mxu0 %v776
      %782 = vmatprep.subr.mxu0 0.0
      %783 = vmatpush1.msra.mxu0 0.0
      %784 = vmatprep.subr.mxu0 0.0
      %785 = vmatpush1.msra.mxu0 0.0
      %786 = vmatprep.subr.mxu0 0.0
      %787 = vmatpush1.msra.mxu0 0.0
      %788 = vmatprep.subr.mxu0 0.0
      %789 = vmatpush1.msra.mxu0 0.0
      %790 = vmatprep.subr.mxu0 0.0
      %791 = vmatpush1.msra.mxu0 0.0
      %792 = vmatprep.subr.mxu0 0.0
      %793 = vmatpush1.msra.mxu0 0.0
      %794 = vmatprep.subr.mxu0 0.0
      %795 = vmatpush1.msra.mxu0 0.0
      %796 = vmatprep.subr.mxu0 0.0
      %797 = vmatpush1.msra.mxu0 0.0
      %798 = vmatprep.subr.mxu0 0.0
      %799 = vmatpush1.msra.mxu0 0.0
      %800 = vmatprep.subr.mxu0 0.0
      %801 = vmatpush1.msra.mxu0 0.0
      %802 = vmatprep.subr.mxu0 0.0
      %803 = vmatpush1.msra.mxu0 0.0
      %804 = vmatprep.subr.mxu0 0.0
      %805 = vmatpush1.msra.mxu0 0.0
      %806 = vmatprep.subr.mxu0 0.0
      %807 = vmatpush1.msra.mxu0 0.0
      %808 = vmatprep.subr.mxu0 0.0
      %809 = vmatpush1.msra.mxu0 0.0
      %810 = vmatprep.subr.mxu0 0.0
      %811 = vmatpush1.msra.mxu0 0.0
      %812 = vmatprep.subr.mxu0 0.0
      %813 = vmatpush1.msra.mxu0 0.0
      %814 = vmatprep.subr.mxu0 0.0
      %815 = vmatpush1.msra.mxu0 0.0
      %816 = vmatprep.subr.mxu0 0.0
      %817 = vmatpush1.msra.mxu0 0.0
      %818 = vmatprep.subr.mxu0 0.0
      %819 = vmatpush1.msra.mxu0 0.0
      %820 = vmatprep.subr.mxu0 0.0
      %821 = vmatpush1.msra.mxu0 0.0
      %822 = vmatprep.subr.mxu0 0.0
      %823 = vmatpush1.msra.mxu0 0.0
      %824 = vmatprep.subr.mxu0 0.0
      %825 = vmatpush1.msra.mxu0 0.0
      %826 = vmatprep.subr.mxu0 0.0
      %827 = vmatpush1.msra.mxu0 0.0
      %828 = vmatprep.subr.mxu0 0.0
      %829 = vmatpush1.msra.mxu0 0.0
      %830 = vmatprep.subr.mxu0 0.0
      %831 = vmatpush1.msra.mxu0 0.0
      %832 = vmatprep.subr.mxu0 0.0
      %833 = vmatpush1.msra.mxu0 0.0
      %834 = vmatprep.subr.mxu0 0.0
      %835 = vmatpush1.msra.mxu0 0.0
      %836 = vmatprep.subr.mxu0 0.0
      %837 = vmatpush1.msra.mxu0 0.0
      %838 = vmatprep.subr.mxu0 0.0
      %839 = vmatpush1.msra.mxu0 0.0
      %840 = vmatprep.subr.mxu0 0.0
      %841 = vmatpush1.msra.mxu0 0.0
      %842 = vmatprep.subr.mxu0 0.0
      %843 = vmatpush1.msra.mxu0 0.0
      %844 = vmatprep.mubr.f32.mxu0 0.0
      %845 = vmatmul.mubr.f32.gmra.mrb[0].mxu0 %v774
      %v846 = vpop.f32.mrb[0].mxu0
      %v847 = vadd.f32 0.0, %v846
      %v848 = vpop.f32.mrb[0].mxu0
      %v849 = vadd.f32 0.0, %v848
      %850 = vdwg.mxu0
      %v851 = vmul.f32 %v847, %v175
      %v852 = vmul.f32 %v849, %v176
      %v853 = vadd.f32 %v755, %v851
      %v854 = vadd.f32 %v756, %v852
      %v855 = vld [vmem:[%s138] sm:$0xff]
      %v856 = vld [vmem:[%s138 + $0x8] sm:$0xf]
      %s857 = scalar_lea.vmem %s0, 56
      %v858 = vld [vmem:[%s857] sm:$0xff]
      %v861 = vcombine.high %v855, %v855
      %862 = vrot.lane.b32.xlu0 %v855, 95
      %v863 = vpop.permute.xlu0 %862
      %864 = vrot.lane.b32.xlu0 %v861, 95
      %v865 = vpop.permute.xlu0 %864
      %866 = vrot.lane.b32.xlu0 %v856, 95
      %v867 = vpop.permute.xlu0 %866
      %vm868 = vcmask 777216
      %v869 = vsel %vm868, %v863, %v865
      %v870 = vsel %vm868, %v865, %v867
      %v872 = vsel %vm187, %v858, 0
      %v874 = vsel %vm191, %v869, 0
      %v876 = vsel %vm191, %v870, 0
      %878 = vmatprep.subr.mxu0 %v876
      %879 = vmatpush1.msra.mxu0 %v874
      %880 = vmatprep.subr.mxu0 0.0
      %881 = vmatpush1.msra.mxu0 0.0
      %882 = vmatprep.subr.mxu0 0.0
      %883 = vmatpush1.msra.mxu0 0.0
      %884 = vmatprep.subr.mxu0 0.0
      %885 = vmatpush1.msra.mxu0 0.0
      %886 = vmatprep.subr.mxu0 0.0
      %887 = vmatpush1.msra.mxu0 0.0
      %888 = vmatprep.subr.mxu0 0.0
      %889 = vmatpush1.msra.mxu0 0.0
      %890 = vmatprep.subr.mxu0 0.0
      %891 = vmatpush1.msra.mxu0 0.0
      %892 = vmatprep.subr.mxu0 0.0
      %893 = vmatpush1.msra.mxu0 0.0
      %894 = vmatprep.subr.mxu0 0.0
      %895 = vmatpush1.msra.mxu0 0.0
      %896 = vmatprep.subr.mxu0 0.0
      %897 = vmatpush1.msra.mxu0 0.0
      %898 = vmatprep.subr.mxu0 0.0
      %899 = vmatpush1.msra.mxu0 0.0
      %900 = vmatprep.subr.mxu0 0.0
      %901 = vmatpush1.msra.mxu0 0.0
      %902 = vmatprep.subr.mxu0 0.0
      %903 = vmatpush1.msra.mxu0 0.0
      %904 = vmatprep.subr.mxu0 0.0
      %905 = vmatpush1.msra.mxu0 0.0
      %906 = vmatprep.subr.mxu0 0.0
      %907 = vmatpush1.msra.mxu0 0.0
      %908 = vmatprep.subr.mxu0 0.0
      %909 = vmatpush1.msra.mxu0 0.0
      %910 = vmatprep.subr.mxu0 0.0
      %911 = vmatpush1.msra.mxu0 0.0
      %912 = vmatprep.subr.mxu0 0.0
      %913 = vmatpush1.msra.mxu0 0.0
      %914 = vmatprep.subr.mxu0 0.0
      %915 = vmatpush1.msra.mxu0 0.0
      %916 = vmatprep.subr.mxu0 0.0
      %917 = vmatpush1.msra.mxu0 0.0
      %918 = vmatprep.subr.mxu0 0.0
      %919 = vmatpush1.msra.mxu0 0.0
      %920 = vmatprep.subr.mxu0 0.0
      %921 = vmatpush1.msra.mxu0 0.0
      %922 = vmatprep.subr.mxu0 0.0
      %923 = vmatpush1.msra.mxu0 0.0
      %924 = vmatprep.subr.mxu0 0.0
      %925 = vmatpush1.msra.mxu0 0.0
      %926 = vmatprep.subr.mxu0 0.0
      %927 = vmatpush1.msra.mxu0 0.0
      %928 = vmatprep.subr.mxu0 0.0
      %929 = vmatpush1.msra.mxu0 0.0
      %930 = vmatprep.subr.mxu0 0.0
      %931 = vmatpush1.msra.mxu0 0.0
      %932 = vmatprep.subr.mxu0 0.0
      %933 = vmatpush1.msra.mxu0 0.0
      %934 = vmatprep.subr.mxu0 0.0
      %935 = vmatpush1.msra.mxu0 0.0
      %936 = vmatprep.subr.mxu0 0.0
      %937 = vmatpush1.msra.mxu0 0.0
      %938 = vmatprep.subr.mxu0 0.0
      %939 = vmatpush1.msra.mxu0 0.0
      %940 = vmatprep.subr.mxu0 0.0
      %941 = vmatpush1.msra.mxu0 0.0
      %942 = vmatprep.mubr.f32.mxu0 0.0
      %943 = vmatmul.mubr.f32.gmra.mrb[0].mxu0 %v872
      %v944 = vpop.f32.mrb[0].mxu0
      %v945 = vadd.f32 0.0, %v944
      %v946 = vpop.f32.mrb[0].mxu0
      %v947 = vadd.f32 0.0, %v946
      %948 = vdwg.mxu0
      %v949 = vadd.f32 %v853, %v945
      %v950 = vadd.f32 %v854, %v947
      %v951 = vld [vmem:[%s138] sm:$0xff]
      %v952 = vld [vmem:[%s138 + $0x8] sm:$0xf]
      %s953 = scalar_lea.vmem %s0, 64
      %v954 = vld [vmem:[%s953] sm:$0xff]
      %v957 = vcombine.high %v951, %v951
      %958 = vrot.lane.b32.xlu0 %v951, 94
      %v959 = vpop.permute.xlu0 %958
      %960 = vrot.lane.b32.xlu0 %v957, 94
      %v961 = vpop.permute.xlu0 %960
      %962 = vrot.lane.b32.xlu0 %v952, 94
      %v963 = vpop.permute.xlu0 %962
      %vm964 = vcmask 769024
      %v965 = vsel %vm964, %v959, %v961
      %v966 = vsel %vm964, %v961, %v963
      %v968 = vsel %vm187, %v954, 0
      %v970 = vsel %vm191, %v965, 0
      %v972 = vsel %vm191, %v966, 0
      %974 = vmatprep.subr.mxu0 %v972
      %975 = vmatpush1.msra.mxu0 %v970
      %976 = vmatprep.subr.mxu0 0.0
      %977 = vmatpush1.msra.mxu0 0.0
      %978 = vmatprep.subr.mxu0 0.0
      %979 = vmatpush1.msra.mxu0 0.0
      %980 = vmatprep.subr.mxu0 0.0
      %981 = vmatpush1.msra.mxu0 0.0
      %982 = vmatprep.subr.mxu0 0.0
      %983 = vmatpush1.msra.mxu0 0.0
      %984 = vmatprep.subr.mxu0 0.0
      %985 = vmatpush1.msra.mxu0 0.0
      %986 = vmatprep.subr.mxu0 0.0
      %987 = vmatpush1.msra.mxu0 0.0
      %988 = vmatprep.subr.mxu0 0.0
      %989 = vmatpush1.msra.mxu0 0.0
      %990 = vmatprep.subr.mxu0 0.0
      %991 = vmatpush1.msra.mxu0 0.0
      %992 = vmatprep.subr.mxu0 0.0
      %993 = vmatpush1.msra.mxu0 0.0
      %994 = vmatprep.subr.mxu0 0.0
      %995 = vmatpush1.msra.mxu0 0.0
      %996 = vmatprep.subr.mxu0 0.0
      %997 = vmatpush1.msra.mxu0 0.0
      %998 = vmatprep.subr.mxu0 0.0
      %999 = vmatpush1.msra.mxu0 0.0
      %1000 = vmatprep.subr.mxu0 0.0
      %1001 = vmatpush1.msra.mxu0 0.0
      %1002 = vmatprep.subr.mxu0 0.0
      %1003 = vmatpush1.msra.mxu0 0.0
      %1004 = vmatprep.subr.mxu0 0.0
      %1005 = vmatpush1.msra.mxu0 0.0
      %1006 = vmatprep.subr.mxu0 0.0
      %1007 = vmatpush1.msra.mxu0 0.0
      %1008 = vmatprep.subr.mxu0 0.0
      %1009 = vmatpush1.msra.mxu0 0.0
      %1010 = vmatprep.subr.mxu0 0.0
      %1011 = vmatpush1.msra.mxu0 0.0
      %1012 = vmatprep.subr.mxu0 0.0
      %1013 = vmatpush1.msra.mxu0 0.0
      %1014 = vmatprep.subr.mxu0 0.0
      %1015 = vmatpush1.msra.mxu0 0.0
      %1016 = vmatprep.subr.mxu0 0.0
      %1017 = vmatpush1.msra.mxu0 0.0
      %1018 = vmatprep.subr.mxu0 0.0
      %1019 = vmatpush1.msra.mxu0 0.0
      %1020 = vmatprep.subr.mxu0 0.0
      %1021 = vmatpush1.msra.mxu0 0.0
      %1022 = vmatprep.subr.mxu0 0.0
      %1023 = vmatpush1.msra.mxu0 0.0
      %1024 = vmatprep.subr.mxu0 0.0
      %1025 = vmatpush1.msra.mxu0 0.0
      %1026 = vmatprep.subr.mxu0 0.0
      %1027 = vmatpush1.msra.mxu0 0.0
      %1028 = vmatprep.subr.mxu0 0.0
      %1029 = vmatpush1.msra.mxu0 0.0
      %1030 = vmatprep.subr.mxu0 0.0
      %1031 = vmatpush1.msra.mxu0 0.0
      %1032 = vmatprep.subr.mxu0 0.0
      %1033 = vmatpush1.msra.mxu0 0.0
      %1034 = vmatprep.subr.mxu0 0.0
      %1035 = vmatpush1.msra.mxu0 0.0
      %1036 = vmatprep.subr.mxu0 0.0
      %1037 = vmatpush1.msra.mxu0 0.0
      %1038 = vmatprep.mubr.f32.mxu0 0.0
      %1039 = vmatmul.mubr.f32.gmra.mrb[0].mxu0 %v968
      %v1040 = vpop.f32.mrb[0].mxu0
      %v1041 = vadd.f32 0.0, %v1040
      %v1042 = vpop.f32.mrb[0].mxu0
      %v1043 = vadd.f32 0.0, %v1042
      %1044 = vdwg.mxu0
      %v1045 = vmul.f32 %v1041, %v181
      %v1046 = vmul.f32 %v1043, %v182
      %v1047 = vadd.f32 %v949, %v1045
      %v1048 = vadd.f32 %v950, %v1046
      %v1049 = vand.u32 2147483647, %v1047
      %vm1050 = vcmp.le.f32.partialorder %v1049, 0.7853982
      %vm1051 = vcmp.lt.s32.totalorder %v1047, 0
      %v1052 = vand.u32 %v1047, 2139095040
      %v1053 = vshrl.u32 %v1052, 23
      %v1054 = vsub.s32 %v1053, 127
      %v1055 = vand.u32 2147483647, %v1047
      %v1056 = vand.u32 %v1055, 8388607
      %v1057 = vor.u32 %v1056, 8388608
      %v1058 = vsub.s32 0, %v1057
      %v1059 = vadd.s32 %v1054, 1
      %vm1060 = vcmp.gt.s32.totalorder %v1059, 0
      %v1061 = vsel %vm1060, %v1059, 0
      %v1062 = vshrl.u32 %v1061, 5
      %v1063 = vand.u32 %v1061, 31
      %v1064 = vsub.s32 32, %v1063
      %v1065 = vshrl.u32 683565275, %v1064
      %v1066 = vshll.u32 683565275, %v1063
      %v1067 = vshrl.u32 2475754826, %v1064
      %v1068 = vor.u32 %v1066, %v1067
      %v1069 = vshll.u32 2475754826, %v1063
      %v1070 = vshrl.u32 2131351028, %v1064
      %v1071 = vor.u32 %v1069, %v1070
      %v1072 = vshll.u32 2131351028, %v1063
      %v1073 = vshrl.u32 2102212464, %v1064
      %v1074 = vor.u32 %v1072, %v1073
      %v1075 = vshll.u32 2102212464, %v1063
      %v1076 = vshrl.u32 920167782, %v1064
      %v1077 = vor.u32 %v1075, %v1076
      %v1078 = vshll.u32 920167782, %v1063
      %v1079 = vshrl.u32 1326507024, %v1064
      %v1080 = vor.u32 %v1078, %v1079
      %vm1081 = vcmp.lt.s32.totalorder %v1062, 1
      %vm1082 = vcmp.lt.s32.totalorder %v1062, 2
      %vm1083 = vcmp.lt.s32.totalorder %v1062, 3
      %vm1084 = vcmp.lt.s32.totalorder %v1062, 4
      %v1085 = vsel %vm1081, %v1065, %v1068
      %v1086 = vsel %vm1084, %v1074, 2102212464
      %v1087 = vsel %vm1083, %v1071, %v1086
      %v1088 = vsel %vm1082, %v1085, %v1087
      %v1089 = vsel %vm1081, %v1068, %v1071
      %v1090 = vsel %vm1084, %v1077, 920167782
      %v1091 = vsel %vm1083, %v1074, %v1090
      %v1092 = vsel %vm1082, %v1089, %v1091
      %v1093 = vsel %vm1081, %v1071, %v1074
      %v1094 = vsel %vm1084, %v1080, 1326507024
      %v1095 = vsel %vm1083, %v1077, %v1094
      %v1096 = vsel %vm1082, %v1093, %v1095
      %v1097 = vshll.u32 %v1057, 8
      %v1098 = vmul.u32.u64.compose %v1097, %v1096
      %v1099 = vextract.low.u32 %v1098
      %v1100 = vextract.high.u32 %v1098
      %v1101 = vmul.u32.u64.compose %v1097, %v1092
      %v1102 = vextract.low.u32 %v1101
      %v1103 = vextract.high.u32 %v1101
      %v1104 = vmul.u32 %v1097, %v1088
      %v1105 = vadd.s32 %v1100, %v1102
      %vm1106 = vc.u32 %v1100, %v1102
      %v1107 = vadd.s32 %v1103, 1
      %v1108 = vsel %vm1106, %v1107, %v1103
      %v1109 = vadd.s32 %v1104, %v1108
      %v1110 = vadd.s32 %v1109, 536870912
      %v1111 = vshrl.u32 %v1110, 30
      %v1112 = vshll.u32 %v1111, 30
      %v1113 = vsub.s32 %v1109, %v1112
      %vm1114 = vcmp.lt.s32.totalorder %v1113, 0
      %v1115 = vsub.s32 0, %v1113
      %v1116 = vsel %vm1114, %v1115, %v1113
      %v1117 = vclz %v1116
      %v1118 = vsub.s32 %v1117, 2
      %vm1119 = vcmp.gt.s32.totalorder 0, %v1118
      %v1120 = vsel %vm1119, 0, %v1118
      %v1121 = vsub.s32 32, %v1120
      %v1122 = vshll.u32 %v1113, %v1120
      %v1123 = vshrl.u32 %v1105, %v1121
      %v1124 = vor.u32 %v1122, %v1123
      %v1125 = vsub.s32 4294967266, %v1120
      %v1126 = vadd.s32 %v1125, 127
      %v1127 = vshll.u32 %v1126, 23
      %v1128 = vor.u32 4788187, %v1127
      %v1129 = vand.u32 2147483647, %v1128
      %v1131 = vcvt.s32.f32 %v1124
      %v1132 = vmul.f32 %v1131, %v1129
      %v1133 = vxor.u32 %v1132, 2147483648
      %v1134 = vsel %vm1051, %v1133, %v1132
      %v1135 = vsub.s32 4, %v1111
      %v1136 = vsel %vm1051, %v1135, %v1111
      %v1137 = vsel %vm1050, %v1047, %v1134
      %v1138 = vsel %vm1050, 0, %v1136
      %v1139 = vcosq.f32.pop %v1137
      %v1140 = vsinq.f32.pop %v1137
      %vm1141 = vweird.f32 %v1047
      %v1142 = vadd.s32 %v1138, 3
      %v1143 = vand.u32 %v1142, 3
      %vm1144 = vcmp.lt.s32.totalorder %v1143, 2
      %vm1145 = vcmp.eq.s32.totalorder %v1143, 0
      %v1146 = vxor.u32 %v1140, 2147483648
      %v1147 = vsel %vm1145, %v1139, %v1146
      %vm1148 = vcmp.eq.s32.totalorder %v1143, 2
      %v1149 = vxor.u32 %v1139, 2147483648
      %v1150 = vsel %vm1148, %v1149, %v1140
      %v1151 = vsel %vm1144, %v1147, %v1150
      %v1152 = vsel %vm1141, nan, %v1151
      %v1153 = vand.u32 2147483647, %v1048
      %vm1154 = vcmp.le.f32.partialorder %v1153, 0.7853982
      %vm1155 = vcmp.lt.s32.totalorder %v1048, 0
      %v1156 = vand.u32 %v1048, 2139095040
      %v1157 = vshrl.u32 %v1156, 23
      %v1158 = vsub.s32 %v1157, 127
      %v1159 = vand.u32 2147483647, %v1048
      %v1160 = vand.u32 %v1159, 8388607
      %v1161 = vor.u32 %v1160, 8388608
      %v1162 = vsub.s32 0, %v1161
      %v1163 = vadd.s32 %v1158, 1
      %vm1164 = vcmp.gt.s32.totalorder %v1163, 0
      %v1165 = vsel %vm1164, %v1163, 0
      %v1166 = vshrl.u32 %v1165, 5
      %v1167 = vand.u32 %v1165, 31
      %v1168 = vsub.s32 32, %v1167
      %v1169 = vshrl.u32 683565275, %v1168
      %v1170 = vshll.u32 683565275, %v1167
      %v1171 = vshrl.u32 2475754826, %v1168
      %v1172 = vor.u32 %v1170, %v1171
      %v1173 = vshll.u32 2475754826, %v1167
      %v1174 = vshrl.u32 2131351028, %v1168
      %v1175 = vor.u32 %v1173, %v1174
      %v1176 = vshll.u32 2131351028, %v1167
      %v1177 = vshrl.u32 2102212464, %v1168
      %v1178 = vor.u32 %v1176, %v1177
      %v1179 = vshll.u32 2102212464, %v1167
      %v1180 = vshrl.u32 920167782, %v1168
      %v1181 = vor.u32 %v1179, %v1180
      %v1182 = vshll.u32 920167782, %v1167
      %v1183 = vshrl.u32 1326507024, %v1168
      %v1184 = vor.u32 %v1182, %v1183
      %vm1185 = vcmp.lt.s32.totalorder %v1166, 1
      %vm1186 = vcmp.lt.s32.totalorder %v1166, 2
      %vm1187 = vcmp.lt.s32.totalorder %v1166, 3
      %vm1188 = vcmp.lt.s32.totalorder %v1166, 4
      %v1189 = vsel %vm1185, %v1169, %v1172
      %v1190 = vsel %vm1188, %v1178, 2102212464
      %v1191 = vsel %vm1187, %v1175, %v1190
      %v1192 = vsel %vm1186, %v1189, %v1191
      %v1193 = vsel %vm1185, %v1172, %v1175
      %v1194 = vsel %vm1188, %v1181, 920167782
      %v1195 = vsel %vm1187, %v1178, %v1194
      %v1196 = vsel %vm1186, %v1193, %v1195
      %v1197 = vsel %vm1185, %v1175, %v1178
      %v1198 = vsel %vm1188, %v1184, 1326507024
      %v1199 = vsel %vm1187, %v1181, %v1198
      %v1200 = vsel %vm1186, %v1197, %v1199
      %v1201 = vshll.u32 %v1161, 8
      %v1202 = vmul.u32.u64.compose %v1201, %v1200
      %v1203 = vextract.low.u32 %v1202
      %v1204 = vextract.high.u32 %v1202
      %v1205 = vmul.u32.u64.compose %v1201, %v1196
      %v1206 = vextract.low.u32 %v1205
      %v1207 = vextract.high.u32 %v1205
      %v1208 = vmul.u32 %v1201, %v1192
      %v1209 = vadd.s32 %v1204, %v1206
      %vm1210 = vc.u32 %v1204, %v1206
      %v1211 = vadd.s32 %v1207, 1
      %v1212 = vsel %vm1210, %v1211, %v1207
      %v1213 = vadd.s32 %v1208, %v1212
      %v1214 = vadd.s32 %v1213, 536870912
      %v1215 = vshrl.u32 %v1214, 30
      %v1216 = vshll.u32 %v1215, 30
      %v1217 = vsub.s32 %v1213, %v1216
      %vm1218 = vcmp.lt.s32.totalorder %v1217, 0
      %v1219 = vsub.s32 0, %v1217
      %v1220 = vsel %vm1218, %v1219, %v1217
      %v1221 = vclz %v1220
      %v1222 = vsub.s32 %v1221, 2
      %vm1223 = vcmp.gt.s32.totalorder 0, %v1222
      %v1224 = vsel %vm1223, 0, %v1222
      %v1225 = vsub.s32 32, %v1224
      %v1226 = vshll.u32 %v1217, %v1224
      %v1227 = vshrl.u32 %v1209, %v1225
      %v1228 = vor.u32 %v1226, %v1227
      %v1229 = vsub.s32 4294967266, %v1224
      %v1230 = vadd.s32 %v1229, 127
      %v1231 = vshll.u32 %v1230, 23
      %v1232 = vor.u32 4788187, %v1231
      %v1233 = vand.u32 2147483647, %v1232
      %v1235 = vcvt.s32.f32 %v1228
      %v1236 = vmul.f32 %v1235, %v1233
      %v1237 = vxor.u32 %v1236, 2147483648
      %v1238 = vsel %vm1155, %v1237, %v1236
      %v1239 = vsub.s32 4, %v1215
      %v1240 = vsel %vm1155, %v1239, %v1215
      %v1241 = vsel %vm1154, %v1048, %v1238
      %v1242 = vsel %vm1154, 0, %v1240
      %v1243 = vcosq.f32.pop %v1241
      %v1244 = vsinq.f32.pop %v1241
      %vm1245 = vweird.f32 %v1048
      %v1246 = vadd.s32 %v1242, 3
      %v1247 = vand.u32 %v1246, 3
      %vm1248 = vcmp.lt.s32.totalorder %v1247, 2
      %vm1249 = vcmp.eq.s32.totalorder %v1247, 0
      %v1250 = vxor.u32 %v1244, 2147483648
      %v1251 = vsel %vm1249, %v1243, %v1250
      %vm1252 = vcmp.eq.s32.totalorder %v1247, 2
      %v1253 = vxor.u32 %v1243, 2147483648
      %v1254 = vsel %vm1252, %v1253, %v1244
      %v1255 = vsel %vm1248, %v1251, %v1254
      %v1256 = vsel %vm1245, nan, %v1255
      %v1259 = vcombine.low %v1152, %v1256
      %1261 = vst [vmem:[%s143] sm:$0x77] %v1259
      %p1262 = scmp.lt.s32.totalorder %s13, 1
      %s1263 = scalar_select %p1262, %s13, 1
      %s1264 = smul.addr %s1263, 2
      %s1265 = smul.addr %s1264, 4
      %s1266 = scalar_lea.vmem %s2, %s1265
      // Predicated region
      $region29: #{tpu_custom_call.1} parent=27 // pred_check
        %p1267 = pneg %p78
      $region30: #{tpu_custom_call.1} parent=27 // pred_check_branch
        %1269 = sbr.rel (%p1267) target = $region32
      $region31: #{tpu_custom_call.1} parent=27 // pred_region
        _
      $region32: #{tpu_custom_call.1} parent=27 // pred_fallthru
        _
    $region28: #{tpu_custom_call.1} parent=5 // pred_fallthru
      _
    %p1270 = scmp.le.s32.totalorder 2, %s8
    // Predicated region
    $region33: #{tpu_custom_call.1} parent=5 // pred_check
      %p1271 = pneg %p1270
    $region34: #{tpu_custom_call.1} parent=5 // pred_check_branch
      %1273 = sbr.rel (%p1271) target = $region36
    $region35: #{tpu_custom_call.1} parent=5 // pred_region
      %s1274 = ssub.s32 %s8, 2
      // Predicated region
      $region37: #{tpu_custom_call.1} parent=35 // pred_check
        %p1275 = pneg %p84
      $region38: #{tpu_custom_call.1} parent=35 // pred_check_branch
        %1277 = sbr.rel (%p1275) target = $region40
      $region39: #{tpu_custom_call.1} parent=35 // pred_region
        %p1278 = scmp.lt.s32.totalorder %s14, 1
        %s1279 = scalar_select %p1278, %s14, 1
        %s1280 = smul.addr %s1279, 2
        %s1281 = smul.addr %s1280, 4
        %s1282 = scalar_lea.vmem %s2, %s1281
      $region40: #{tpu_custom_call.1} parent=35 // pred_fallthru
        _
    $region36: #{tpu_custom_call.1} parent=5 // pred_fallthru
      _
  $region6: #{tpu_custom_call.1} parent=0 // loop_footer
    %s12 = sadd.s32 1, %s8
  $region7: #{tpu_custom_call.1} parent=0 // loop_footer_branch
    %7 = sbr.rel target = $region3
  $region8: #{tpu_custom_call.1} parent=0 // loop_exit
    _

</llo_original>
